<compile_context>
chip_gen: v6e
topology: v6e:2x2x1
jax: 0.10.0
libtpu: 0.0.40
codegen_flags: <defaults>
</compile_context>

<pallas_src>
import numpy as np
import jax
import jax.numpy as jnp
from jax.experimental import pallas as pl
from jax.experimental.pallas import tpu as pltpu


def _pt_bilinear_matrix(n_in: int, n_out: int) -> np.ndarray:
    """1-D interpolation matrix matching torch.nn.Upsample(mode='bilinear',
    align_corners=False): out = U @ in.  Rows sum to 1."""
    U = np.zeros((n_out, n_in), dtype=np.float32)
    scale = n_in / n_out
    for o in range(n_out):
        src = (o + 0.5) * scale - 0.5
        src = max(src, 0.0)                      # PyTorch clamps negative src
        i0 = int(np.floor(src))
        i1 = min(i0 + 1, n_in - 1)
        l1 = src - i0
        U[o, i0] += 1.0 - l1
        U[o, i1] += l1
    return U


def _num_tensorcores() -> int:
    """Heuristic: dual-TensorCore chips (v4/v5p/v7x megacore) vs single-TC parts."""
    try:
        kind = jax.devices()[0].device_kind.lower()
    except Exception:
        return 1
    return 2 if any(t in kind for t in ("v4", "v5p", "v7")) else 1


_TARGET_CHUNK_BYTES = 1 << 19     # ~512 KiB of streamed activations per grid step
_VMEM_ACT_BUDGET = 40 << 20       # double-buffered activation blocks budget (v7x 64 MiB safe)
_MAX_BC = 32                      # block-diagonal px/pf MXU waste stays negligible


def _choose_batch_chunk(B, Sx, Sf, bytes_per_image, *, n_cores):
    """Byte-targeted batch chunk that tiles B exactly and keeps streamed blocks legal."""
    def ok(bc):
        if B % bc:
            return False
        if bc == B:                              # single chunk -> full-extent blocks
            return True
        # (8,128) rule: sublane dims of the streamed blocks must be 8-divisible
        return (bc * Sx) % 8 == 0 and (bc * Sf) % 8 == 0

    want = max(1, -(-_TARGET_CHUNK_BYTES // bytes_per_image))        # ceil div
    cap = max(1, min(_MAX_BC, _VMEM_ACT_BUDGET // (2 * bytes_per_image)))
    if n_cores > 1 and B > 1:
        cap = min(cap, max(1, B // n_cores))     # keep >= n_cores parallel grid steps
    bc = min(max(want, 1), cap, B)
    for c in range(bc, 0, -1):                   # largest legal chunk <= target
        if ok(c):
            return c
    for c in range(bc + 1, B + 1):               # otherwise smallest legal above it
        if ok(c):
            return c
    return B


def boost_head_kernel(px_ref, pf_ref, vr_ref, vm_ref, bias_ref,
                      x_ref, f_ref, out_ref):
    # Weighted spatial pools as block-diagonal MXU matmuls (bc images per step):
    # px folds bilinear-x2-upsample + global-average-pool (1x1-conv order
    # invariant); pf is the plain per-image spatial mean of the stride-16 map.
    xp = jnp.dot(px_ref[...], x_ref[...],
                 preferred_element_type=jnp.float32)            # (bc, Cin) f32
    fp = jnp.dot(pf_ref[...], f_ref[...],
                 preferred_element_type=jnp.float32)            # (bc, Cf)  f32
    # Folded (1x1 conv -> Linear(256,1)) channel weights, lane-major (1, C) rows:
    # VPU multiply + XLU lane reduction (both idle units) instead of N=1 MXU matmuls.
    val = (jnp.sum(xp * vr_ref[...], axis=-1)
           + jnp.sum(fp * vm_ref[...], axis=-1)
           + bias_ref[0, 0])                                    # (bc,)
    out_ref[0, :] = val                                         # lane-dense store


def boost_head(x, feats, w_r, b_r, w_m, b_m, w_l, b_l, *,
               batch_chunk=None, stream_dtype=jnp.float32):
    """x: (B, Hs, Ws, 1536) NHWC backbone output; feats: (B, 2*Hs, 2*Ws, 136).
    w_r: (1536,256), b_r: (1,256), w_m: (136,256), b_m: (1,256),
    w_l: (1,256), b_l: (1,1).  Returns (B, 1), matching the PyTorch head."""
    B, Hs, Ws, Cin = x.shape
    Bf, Ho, Wo, Cf = feats.shape
    assert Bf == B
    Sx, Sf = Hs * Ws, Ho * Wo
    itemsize = np.dtype(stream_dtype).itemsize
    bytes_per_image = (Sx * Cin + Sf * Cf) * itemsize

    if batch_chunk is None:
        batch_chunk = _choose_batch_chunk(B, Sx, Sf, bytes_per_image,
                                          n_cores=_num_tensorcores())
    bc = batch_chunk
    assert B % bc == 0 and (bc == B or ((bc * Sx) % 8 == 0 and (bc * Sf) % 8 == 0)), \
        (B, bc, Sx, Sf)
    n_chunks = B // bc

    hi = jax.lax.Precision.HIGHEST

    # --- host-side algebraic fold (exact; the whole post-backbone head is linear) ---
    u_pool = np.kron(_pt_bilinear_matrix(Hs, Ho).mean(0, keepdims=True),
                     _pt_bilinear_matrix(Ws, Wo).mean(0, keepdims=True))        # (1, Sx)
    f_pool = np.full((1, Sf), 1.0 / Sf, np.float32)                             # (1, Sf)
    # Block-diagonal pooling matrices process bc images per grid step.
    px = jnp.asarray(np.kron(np.eye(bc, dtype=np.float32), u_pool.astype(np.float32)),
                     dtype=stream_dtype)                                         # (bc, bc*Sx)
    pf = jnp.asarray(np.kron(np.eye(bc, dtype=np.float32), f_pool),
                     dtype=stream_dtype)                                         # (bc, bc*Sf)
    # Fold the two 1x1-conv weights through the final Linear(256,1): lane-major rows.
    v_r = jnp.dot(w_l, w_r.T, precision=hi)                                      # (1, Cin)
    v_m = jnp.dot(w_l, w_m.T, precision=hi)                                      # (1, Cf)
    bias = jnp.dot(b_r + b_m, w_l.T, precision=hi) + b_l                         # (1, 1)

    # Reshape / cast at HBM level, outside the kernel.
    # TODO(synk): the bf16 cast belongs in the backbone's final op (producer side).
    x2 = x.reshape(B * Sx, Cin).astype(stream_dtype)
    f2 = feats.reshape(B * Sf, Cf).astype(stream_dtype)

    x_blk = bc * Sx * Cin * itemsize
    f_blk = bc * Sf * Cf * itemsize
    vmem_limit = int(min(max(3 * (x_blk + f_blk) + (4 << 20), 16 << 20), 64 << 20))

    flops = 2 * B * (Sx * Cin + Sf * Cf + Cin + Cf)
    bytes_accessed = ((x2.size + f2.size + px.size + pf.size) * itemsize
                      + 4 * (v_r.size + v_m.size + 1 + B))

    out = pl.pallas_call(
        boost_head_kernel,
        out_shape=jax.ShapeDtypeStruct((n_chunks, bc), jnp.float32),
        grid=(n_chunks,),
        in_specs=[
            pl.BlockSpec((bc, bc * Sx), lambda g: (0, 0)),        # px (grid-invariant, tiny)
            pl.BlockSpec((bc, bc * Sf), lambda g: (0, 0)),        # pf (grid-invariant, tiny)
            pl.BlockSpec((1, Cin), lambda g: (0, 0)),             # folded reduce weights (row)
            pl.BlockSpec((1, Cf), lambda g: (0, 0)),              # folded merge weights (row)
            pl.BlockSpec(memory_space=pltpu.MemorySpace.SMEM),    # scalar bias
            pl.BlockSpec((bc * Sx, Cin), lambda g: (g, 0)),       # stride-32 chunk (streamed)
            pl.BlockSpec((bc * Sf, Cf), lambda g: (g, 0)),        # stride-16 chunk (streamed)
        ],
        out_specs=pl.BlockSpec((1, bc), lambda g: (g, 0)),        # lane-dense output row
        compiler_params=pltpu.CompilerParams(
            dimension_semantics=("parallel",),
            vmem_limit_bytes=vmem_limit),
        cost_estimate=pl.CostEstimate(flops=int(flops), transcendentals=0,
                                      bytes_accessed=int(bytes_accessed)),
    )(px, pf, v_r, v_m, bias, x2, f2)
    return out.reshape(B, 1)


# ---------------- float64 NumPy references (independent of the kernel path) ----------------

def boost_head_ref_np(x, feats, w_r, b_r, w_m, b_m, w_l, b_l):
    """Unfolded op order exactly as in the PyTorch module, in float64."""
    x = np.asarray(x, np.float64); feats = np.asarray(feats, np.float64)
    w_r = np.asarray(w_r, np.float64); b_r = np.asarray(b_r, np.float64)
    w_m = np.asarray(w_m, np.float64); b_m = np.asarray(b_m, np.float64)
    w_l = np.asarray(w_l, np.float64); b_l = np.asarray(b_l, np.float64)
    B, Hs, Ws, Cin = x.shape
    _, Ho, Wo, Cf = feats.shape
    U = np.kron(_pt_bilinear_matrix(Hs, Ho),
                _pt_bilinear_matrix(Ws, Wo)).astype(np.float64)
    y = x.reshape(B, Hs * Ws, Cin) @ w_r + b_r            # channel_reduction (1x1 conv)
    up = np.einsum('pq,bqc->bpc', U, y)                   # bilinear x2 upsample
    m = feats.reshape(B, Ho * Wo, Cf) @ w_m + b_m         # channel_merge (1x1 conv)
    pooled = (up + m).mean(axis=1)                        # AdaptiveAvgPool2d((1,1))
    return pooled @ w_l.T + b_l                           # single_linear -> (B, 1)


def boost_head_folded_np(x, feats, w_r, b_r, w_m, b_m, w_l, b_l):
    """The folded formula the kernel implements, in float64 (proves the identity)."""
    x = np.asarray(x, np.float64); feats = np.asarray(feats, np.float64)
    w_r = np.asarray(w_r, np.float64); b_r = np.asarray(b_r, np.float64)
    w_m = np.asarray(w_m, np.float64); b_m = np.asarray(b_m, np.float64)
    w_l = np.asarray(w_l, np.float64); b_l = np.asarray(b_l, np.float64)
    B, Hs, Ws, Cin = x.shape
    _, Ho, Wo, Cf = feats.shape
    u_pool = np.kron(_pt_bilinear_matrix(Hs, Ho).mean(0, keepdims=True),
                     _pt_bilinear_matrix(Ws, Wo).mean(0, keepdims=True)).astype(np.float64)
    xp = np.einsum('s,bsc->bc', u_pool[0], x.reshape(B, Hs * Ws, Cin))
    fp = feats.reshape(B, Ho * Wo, Cf).mean(axis=1)
    return xp @ (w_r @ w_l.T) + fp @ (w_m @ w_l.T) + (b_r + b_m) @ w_l.T + b_l


if __name__ == "__main__":
    # EfficientNet-B3-consistent small shapes: img_size=128 -> stride-32 map is
    # 4x4 with 1536 ch, stride-16 map (features saved at i==5) is 8x8 with 136 ch.
    B, Hs, Ws, Cin = 2, 4, 4, 1536
    Ho, Wo, Cf, Cmid = 2 * Hs, 2 * Ws, 136, 256

    key = jax.random.PRNGKey(0)
    ks = jax.random.split(key, 10)
    x_backbone = jax.random.normal(ks[0], (B, Hs, Ws, Cin), jnp.float32)
    backbone_feats = jax.random.normal(ks[1], (B, Ho, Wo, Cf), jnp.float32)

    # Deterministic synthetic parameters (Conv2d 1x1 weights stored as (Cin, Cout)).
    w_reduce = jax.random.normal(ks[2], (Cin, Cmid), jnp.float32) / np.sqrt(Cin)
    b_reduce = 0.01 * jax.random.normal(ks[3], (1, Cmid), jnp.float32)
    w_merge = jax.random.normal(ks[4], (Cf, Cmid), jnp.float32) / np.sqrt(Cf)
    b_merge = 0.01 * jax.random.normal(ks[5], (1, Cmid), jnp.float32)
    w_lin = jax.random.normal(ks[6], (1, Cmid), jnp.float32) / np.sqrt(Cmid)
    b_lin = 0.01 * jax.random.normal(ks[7], (1, 1), jnp.float32)

    ref = boost_head_ref_np(x_backbone, backbone_feats,
                            w_reduce, b_reduce, w_merge, b_merge, w_lin, b_lin)
    folded = boost_head_folded_np(x_backbone, backbone_feats,
                                  w_reduce, b_reduce, w_merge, b_merge, w_lin, b_lin)
    # 1) The algebraic fold is exact (float64 folded vs unfolded reference).
    np.testing.assert_allclose(folded, ref, rtol=1e-9, atol=1e-12)

    # 2) f32 streaming path (tighter tolerance than v1; covers MXU f32 numerics).
    out32 = boost_head(x_backbone, backbone_feats,
                       w_reduce, b_reduce, w_merge, b_merge, w_lin, b_lin,
                       stream_dtype=jnp.float32)
    out32 = jax.block_until_ready(out32)
    assert out32.shape == (B, 1), out32.shape
    np.testing.assert_allclose(np.asarray(out32, np.float64), ref, rtol=5e-3, atol=5e-3)

    # 3) Larger batch + bf16 activation streaming: exercises n_chunks > 1 (the
    #    byte-targeted chunker picks bc=8 here) and the bandwidth-halving cast.
    B2 = 16
    x_big = jax.random.normal(ks[8], (B2, Hs, Ws, Cin), jnp.float32)
    f_big = jax.random.normal(ks[9], (B2, Ho, Wo, Cf), jnp.float32)
    out_bf16 = boost_head(x_big, f_big,
                          w_reduce, b_reduce, w_merge, b_merge, w_lin, b_lin,
                          stream_dtype=jnp.bfloat16)
    out_bf16 = jax.block_until_ready(out_bf16)
    ref_big = boost_head_ref_np(x_big, f_big,
                                w_reduce, b_reduce, w_merge, b_merge, w_lin, b_lin)
    assert out_bf16.shape == (B2, 1), out_bf16.shape
    np.testing.assert_allclose(np.asarray(out_bf16, np.float64), ref_big,
                               rtol=3e-2, atol=3e-2)

    print("KERNEL_OK")
</pallas_src>

<mosaic_0001>
module attributes {stable_mosaic.version = 11 : i64} {
  func.func @boost_head_kernel(%arg0: i32, %arg1: memref<2x32xf32, #tpu.memory_space<vmem>>, %arg2: memref<2x128xf32, #tpu.memory_space<vmem>>, %arg3: memref<1x1536xf32, #tpu.memory_space<vmem>>, %arg4: memref<1x136xf32, #tpu.memory_space<vmem>>, %arg5: memref<1x1xf32, #tpu.memory_space<smem>>, %arg6: memref<32x1536xf32, #tpu.memory_space<vmem>>, %arg7: memref<128x136xf32, #tpu.memory_space<vmem>>, %arg8: memref<1x2xf32, #tpu.memory_space<vmem>>) attributes {dimension_semantics = [#tpu.dimension_semantics<parallel>], iteration_bounds = array<i64: 1>, scalar_prefetch = 0 : i64, scratch_operands = 0 : i64, tpu.core_type = #tpu.core_type<tc>, window_params = [{pipeline_mode = #tpu.pipeline_mode<synchronous>, transform_indices = @transform_0, window_bounds = array<i64: 2, 32>}, {pipeline_mode = #tpu.pipeline_mode<synchronous>, transform_indices = @transform_1, window_bounds = array<i64: 2, 128>}, {pipeline_mode = #tpu.pipeline_mode<synchronous>, transform_indices = @transform_2, window_bounds = array<i64: 1, 1536>}, {pipeline_mode = #tpu.pipeline_mode<synchronous>, transform_indices = @transform_3, window_bounds = array<i64: 1, 136>}, {transform_indices = @transform_4, window_bounds = array<i64: 1, 1>}, {transform_indices = @transform_5, window_bounds = array<i64: 32, 1536>}, {transform_indices = @transform_6, window_bounds = array<i64: 128, 136>}, {transform_indices = @transform_7, window_bounds = array<i64: 1, 2>}]} {
    %c0 = arith.constant 0 : index
    %c0_0 = arith.constant 0 : index
    %0 = vector.load %arg1[%c0, %c0_0] : memref<2x32xf32, #tpu.memory_space<vmem>>, vector<2x32xf32>
    %c0_1 = arith.constant 0 : index
    %c0_2 = arith.constant 0 : index
    %1 = vector.load %arg6[%c0_1, %c0_2] : memref<32x1536xf32, #tpu.memory_space<vmem>>, vector<32x1536xf32>
    %cst = arith.constant dense<0.000000e+00> : vector<2x1536xf32>
    %2 = tpu.matmul %0, %1, %cst {dimension_numbers = #tpu.dot_dimension_numbers<[1], [0], [0], [1], [0, 0, 1, 1], [], []>} : vector<2x32xf32>, vector<32x1536xf32>, vector<2x1536xf32> -> vector<2x1536xf32>
    %c0_3 = arith.constant 0 : index
    %c0_4 = arith.constant 0 : index
    %3 = vector.load %arg2[%c0_3, %c0_4] : memref<2x128xf32, #tpu.memory_space<vmem>>, vector<2x128xf32>
    %c0_5 = arith.constant 0 : index
    %c0_6 = arith.constant 0 : index
    %4 = vector.load %arg7[%c0_5, %c0_6] : memref<128x136xf32, #tpu.memory_space<vmem>>, vector<128x136xf32>
    %cst_7 = arith.constant dense<0.000000e+00> : vector<2x136xf32>
    %5 = tpu.matmul %3, %4, %cst_7 {dimension_numbers = #tpu.dot_dimension_numbers<[1], [0], [0], [1], [0, 0, 1, 1], [], []>} : vector<2x128xf32>, vector<128x136xf32>, vector<2x136xf32> -> vector<2x136xf32>
    %c0_8 = arith.constant 0 : index
    %c0_9 = arith.constant 0 : index
    %6 = vector.load %arg3[%c0_8, %c0_9] : memref<1x1536xf32, #tpu.memory_space<vmem>>, vector<1x1536xf32>
    %7 = vector.broadcast %6 : vector<1x1536xf32> to vector<2x1536xf32>
    %8 = arith.mulf %2, %7 : vector<2x1536xf32>
    %cst_10 = arith.constant dense<0.000000e+00> : vector<2xf32>
    %9 = vector.multi_reduction <add>, %8, %cst_10 [1] : vector<2x1536xf32> to vector<2xf32>
    %c0_11 = arith.constant 0 : index
    %c0_12 = arith.constant 0 : index
    %10 = vector.load %arg4[%c0_11, %c0_12] : memref<1x136xf32, #tpu.memory_space<vmem>>, vector<1x136xf32>
    %11 = vector.broadcast %10 : vector<1x136xf32> to vector<2x136xf32>
    %12 = arith.mulf %5, %11 : vector<2x136xf32>
    %cst_13 = arith.constant dense<0.000000e+00> : vector<2xf32>
    %13 = vector.multi_reduction <add>, %12, %cst_13 [1] : vector<2x136xf32> to vector<2xf32>
    %14 = arith.addf %9, %13 : vector<2xf32>
    %c0_14 = arith.constant 0 : index
    %c0_15 = arith.constant 0 : index
    %15 = memref.load %arg5[%c0_14, %c0_15] : memref<1x1xf32, #tpu.memory_space<smem>>
    %16 = vector.broadcast %15 : f32 to vector<2xf32>
    %17 = arith.addf %14, %16 : vector<2xf32>
    %c0_16 = arith.constant 0 : index
    %c0_17 = arith.constant 0 : index
    %18 = vector.load %arg8[%c0_16, %c0_17] : memref<1x2xf32, #tpu.memory_space<vmem>>, vector<1x2xf32>
    %19 = vector.shape_cast %18 : vector<1x2xf32> to vector<2xf32>
    %20 = vector.shape_cast %17 : vector<2xf32> to vector<1x2xf32>
    tpu.vector_store %arg8[%c0_16, %c0_17], %20 {strides = array<i32>} : memref<1x2xf32, #tpu.memory_space<vmem>>, vector<1x2xf32>,
    return
  }
  func.func @transform_0(%arg0: i32) -> (i32, i32) {
    %c0_i32 = arith.constant 0 : i32
    %c0_i32_0 = arith.constant 0 : i32
    %c0_i32_1 = arith.constant 0 : i32
    return %c0_i32, %c0_i32_0 : i32, i32
  }
  func.func @transform_1(%arg0: i32) -> (i32, i32) {
    %c0_i32 = arith.constant 0 : i32
    %c0_i32_0 = arith.constant 0 : i32
    %c0_i32_1 = arith.constant 0 : i32
    return %c0_i32, %c0_i32_0 : i32, i32
  }
  func.func @transform_2(%arg0: i32) -> (i32, i32) {
    %c0_i32 = arith.constant 0 : i32
    %c0_i32_0 = arith.constant 0 : i32
    %c0_i32_1 = arith.constant 0 : i32
    return %c0_i32, %c0_i32_0 : i32, i32
  }
  func.func @transform_3(%arg0: i32) -> (i32, i32) {
    %c0_i32 = arith.constant 0 : i32
    %c0_i32_0 = arith.constant 0 : i32
    %c0_i32_1 = arith.constant 0 : i32
    return %c0_i32, %c0_i32_0 : i32, i32
  }
  func.func @transform_4(%arg0: i32) -> (i32, i32) {
    %c0_i32 = arith.constant 0 : i32
    %c0_i32_0 = arith.constant 0 : i32
    %c0_i32_1 = arith.constant 0 : i32
    return %c0_i32, %c0_i32_0 : i32, i32
  }
  func.func @transform_5(%arg0: i32) -> (i32, i32) {
    %c0_i32 = arith.constant 0 : i32
    %c0_i32_0 = arith.constant 0 : i32
    return %arg0, %c0_i32 : i32, i32
  }
  func.func @transform_6(%arg0: i32) -> (i32, i32) {
    %c0_i32 = arith.constant 0 : i32
    %c0_i32_0 = arith.constant 0 : i32
    return %arg0, %c0_i32 : i32, i32
  }
  func.func @transform_7(%arg0: i32) -> (i32, i32) {
    %c0_i32 = arith.constant 0 : i32
    %c0_i32_0 = arith.constant 0 : i32
    return %arg0, %c0_i32 : i32, i32
  }
}

</mosaic_0001>

<llo_original>
// kernel: tpu_custom_call.1
$region0: #{tpu_custom_call.1}
  #allocation0 [shape = 'u32[]', space=smem, size = 0x4, offset = 0x4, fixed_abs, tag = 'smem constant byte address 0x4 - core index']
  #allocation1 [shape = 'u32[144,128]{1,0:T(1,128)}', space=vmem, size = 0x12000, scoped, tag = 'internal scratch']
  #allocation2 [shape = 'f32[1,1]{1,0:T(1,128)S(6)}', space=smem, size = 0x200, scoped, tag = 'scoped memory for tpu_custom_call.1']
  %s0 = inlined_call_operand.vmem [shape: f32[2,32], index: 0, kind: input, shape index: {}]
  %s1 = inlined_call_operand.vmem [shape: f32[2,128], index: 1, kind: input, shape index: {}]
  %s2 = inlined_call_operand.vmem [shape: f32[1,1536], index: 2, kind: input, shape index: {}]
  %s3 = inlined_call_operand.hbm [shape: f32[1,136], index: 3, kind: input, shape index: {}]
  %s4 = inlined_call_operand.<no memory space> [shape: f32[1,1], index: 4, kind: input, shape index: {}]
  %s5 = inlined_call_operand.vmem [shape: f32[32,1536], index: 5, kind: input, shape index: {}]
  %s6 = inlined_call_operand.vmem [shape: f32[128,136], index: 6, kind: input, shape index: {}]
  %s7 = inlined_call_operand.hbm [shape: f32[1,2], index: 7, kind: output, shape index: {}]
  %s8 = sld [smem:[#allocation0]]
  $region42: #{tpu_custom_call.1} parent=0
    _
  %s10 = ssub.s32 1, %s8
  %s11 = scalar_select 0, %s10, %s8
  %12 = sst [smem:[#allocation2]] %s4
  $region1: #{tpu_custom_call.1} parent=0
    #allocation3 [shape = 'u8[1024]{0}', space=vmem, size = 0x400, scoped, tag = 'input window, operand 3, single buffered']
    #allocation4 [shape = 's32[1]{0}', space=sflag, size = 0x4, scoped, tag = 'scoped memory for tpu_custom_call.1']
    #allocation5 [shape = 's32[1]{0}', space=sflag, size = 0x4, scoped, tag = 'scoped memory for tpu_custom_call.1']
    #allocation6 [shape = 'u8[512]{0}', space=vmem, size = 0x400, scoped, tag = 'output window, operand 0, single buffered']
    %13 = vsyncpa [#allocation4], 0
    %14 = vsyncpa [#allocation5], 0
    // Predicated region
    $region2: #{tpu_custom_call.1} parent=1 // pred_check
      _
    $region3: #{tpu_custom_call.1} parent=1 // pred_check_branch
      %16 = sbr.rel (0) target = $region5
    $region4: #{tpu_custom_call.1} parent=1 // pred_region
      _
    $region5: #{tpu_custom_call.1} parent=1 // pred_fallthru
      _
    // Predicated region
    $region6: #{tpu_custom_call.1} parent=1 // pred_check
      _
    $region7: #{tpu_custom_call.1} parent=1 // pred_check_branch
      %18 = sbr.rel (0) target = $region9
    $region8: #{tpu_custom_call.1} parent=1 // pred_region
      _
    $region9: #{tpu_custom_call.1} parent=1 // pred_fallthru
      _
    // Predicated region
    $region10: #{tpu_custom_call.1} parent=1 // pred_check
      _
    $region11: #{tpu_custom_call.1} parent=1 // pred_check_branch
      %20 = sbr.rel (0) target = $region13
    $region12: #{tpu_custom_call.1} parent=1 // pred_region
      _
    $region13: #{tpu_custom_call.1} parent=1 // pred_fallthru
      _
    // Predicated region
    $region14: #{tpu_custom_call.1} parent=1 // pred_check
      _
    $region15: #{tpu_custom_call.1} parent=1 // pred_check_branch
      %22 = sbr.rel (0) target = $region17
    $region16: #{tpu_custom_call.1} parent=1 // pred_region
      %s24 = ssub.s32 32, 32
      %25 = vsyncadd [#allocation4], %s24
      %s27 = sshll.u32 [#allocation3], 4
      %s28 = int_to_ptr.vmem [resolvable:$true] %s27
      %30 = dma.hbm_to_vmem [thread:$0]  %s3, 32, %s28, [#allocation4]
    $region17: #{tpu_custom_call.1} parent=1 // pred_fallthru
      _
    // Predicated region
    $region18: #{tpu_custom_call.1} parent=1 // pred_check
      _
    $region19: #{tpu_custom_call.1} parent=1 // pred_check_branch
      %32 = sbr.rel (0) target = $region21
    $region20: #{tpu_custom_call.1} parent=1 // pred_region
      _
    $region21: #{tpu_custom_call.1} parent=1 // pred_fallthru
      _
    // Predicated region
    $region22: #{tpu_custom_call.1} parent=1 // pred_check
      _
    $region23: #{tpu_custom_call.1} parent=1 // pred_check_branch
      %34 = sbr.rel (0) target = $region25
    $region24: #{tpu_custom_call.1} parent=1 // pred_region
      _
    $region25: #{tpu_custom_call.1} parent=1 // pred_fallthru
      _
    // Predicated region
    $region26: #{tpu_custom_call.1} parent=1 // pred_check
      _
    $region27: #{tpu_custom_call.1} parent=1 // pred_check_branch
      %36 = sbr.rel (0) target = $region29
    $region28: #{tpu_custom_call.1} parent=1 // pred_region
      _
    $region29: #{tpu_custom_call.1} parent=1 // pred_fallthru
      _
    // Predicated region
    $region30: #{tpu_custom_call.1} parent=1 // pred_check
      _
    $region31: #{tpu_custom_call.1} parent=1 // pred_check_branch
      %38 = sbr.rel (0) target = $region33
    $region32: #{tpu_custom_call.1} parent=1 // pred_region
      %39 = dma.done [#allocation4], 32
    $region33: #{tpu_custom_call.1} parent=1 // pred_fallthru
      _
    %v40 = vld [vmem:[%s0] sm:$0x3]
    %v41 = vld [vmem:[%s5] sm:$0xff]
    %v42 = vld [vmem:[%s5 + $0x8] sm:$0xff]
    %v43 = vld [vmem:[%s5 + $0x10] sm:$0xff]
    %v44 = vld [vmem:[%s5 + $0x18] sm:$0xff]
    %v45 = vld [vmem:[%s5 + $0x20] sm:$0xff]
    %v46 = vld [vmem:[%s5 + $0x28] sm:$0xff]
    %v47 = vld [vmem:[%s5 + $0x30] sm:$0xff]
    %v48 = vld [vmem:[%s5 + $0x38] sm:$0xff]
    %v49 = vld [vmem:[%s5 + $0x40] sm:$0xff]
    %v50 = vld [vmem:[%s5 + $0x48] sm:$0xff]
    %v51 = vld [vmem:[%s5 + $0x50] sm:$0xff]
    %v52 = vld [vmem:[%s5 + $0x58] sm:$0xff]
    %v53 = vld [vmem:[%s5 + $0x60] sm:$0xff]
    %v54 = vld [vmem:[%s5 + $0x68] sm:$0xff]
    %v55 = vld [vmem:[%s5 + $0x70] sm:$0xff]
    %v56 = vld [vmem:[%s5 + $0x78] sm:$0xff]
    %v57 = vld [vmem:[%s5 + $0x80] sm:$0xff]
    %v58 = vld [vmem:[%s5 + $0x88] sm:$0xff]
    %v59 = vld [vmem:[%s5 + $0x90] sm:$0xff]
    %v60 = vld [vmem:[%s5 + $0x98] sm:$0xff]
    %v61 = vld [vmem:[%s5 + $0xa0] sm:$0xff]
    %v62 = vld [vmem:[%s5 + $0xa8] sm:$0xff]
    %v63 = vld [vmem:[%s5 + $0xb0] sm:$0xff]
    %v64 = vld [vmem:[%s5 + $0xb8] sm:$0xff]
    %v65 = vld [vmem:[%s5 + $0xc0] sm:$0xff]
    %v66 = vld [vmem:[%s5 + $0xc8] sm:$0xff]
    %v67 = vld [vmem:[%s5 + $0xd0] sm:$0xff]
    %v68 = vld [vmem:[%s5 + $0xd8] sm:$0xff]
    %v69 = vld [vmem:[%s5 + $0xe0] sm:$0xff]
    %v70 = vld [vmem:[%s5 + $0xe8] sm:$0xff]
    %v71 = vld [vmem:[%s5 + $0xf0] sm:$0xff]
    %v72 = vld [vmem:[%s5 + $0xf8] sm:$0xff]
    %v73 = vld [vmem:[%s5 + $0x100] sm:$0xff]
    %v74 = vld [vmem:[%s5 + $0x108] sm:$0xff]
    %v75 = vld [vmem:[%s5 + $0x110] sm:$0xff]
    %v76 = vld [vmem:[%s5 + $0x118] sm:$0xff]
    %v77 = vld [vmem:[%s5 + $0x120] sm:$0xff]
    %v78 = vld [vmem:[%s5 + $0x128] sm:$0xff]
    %v79 = vld [vmem:[%s5 + $0x130] sm:$0xff]
    %v80 = vld [vmem:[%s5 + $0x138] sm:$0xff]
    %v81 = vld [vmem:[%s5 + $0x140] sm:$0xff]
    %v82 = vld [vmem:[%s5 + $0x148] sm:$0xff]
    %v83 = vld [vmem:[%s5 + $0x150] sm:$0xff]
    %v84 = vld [vmem:[%s5 + $0x158] sm:$0xff]
    %v85 = vld [vmem:[%s5 + $0x160] sm:$0xff]
    %v86 = vld [vmem:[%s5 + $0x168] sm:$0xff]
    %v87 = vld [vmem:[%s5 + $0x170] sm:$0xff]
    %v88 = vld [vmem:[%s5 + $0x178] sm:$0xff]
    %vm89 = vcmask 261120
    %v91 = vsel %vm89, %v40, 0
    %93 = vmatprep.subr.mxu0 0.0
    %94 = vmatpush1.msra.mxu0 0.0
    %95 = vmatprep.subr.mxu0 0.0
    %96 = vmatpush1.msra.mxu0 0.0
    %97 = vmatprep.subr.mxu0 0.0
    %98 = vmatpush1.msra.mxu0 0.0
    %99 = vmatprep.subr.mxu0 0.0
    %100 = vmatpush1.msra.mxu0 0.0
    %101 = vmatprep.subr.mxu0 0.0
    %102 = vmatpush1.msra.mxu0 0.0
    %103 = vmatprep.subr.mxu0 0.0
    %104 = vmatpush1.msra.mxu0 0.0
    %105 = vmatprep.subr.mxu0 0.0
    %106 = vmatpush1.msra.mxu0 0.0
    %107 = vmatprep.subr.mxu0 0.0
    %108 = vmatpush1.msra.mxu0 0.0
    %109 = vmatprep.subr.mxu0 0.0
    %110 = vmatpush1.msra.mxu0 0.0
    %111 = vmatprep.subr.mxu0 0.0
    %112 = vmatpush1.msra.mxu0 0.0
    %113 = vmatprep.subr.mxu0 0.0
    %114 = vmatpush1.msra.mxu0 0.0
    %115 = vmatprep.subr.mxu0 0.0
    %116 = vmatpush1.msra.mxu0 0.0
    %117 = vmatprep.subr.mxu0 %v78
    %118 = vmatpush1.msra.mxu0 %v77
    %119 = vmatprep.subr.mxu0 %v66
    %120 = vmatpush1.msra.mxu0 %v65
    %121 = vmatprep.subr.mxu0 %v54
    %122 = vmatpush1.msra.mxu0 %v53
    %123 = vmatprep.subr.mxu0 %v42
    %124 = vmatpush1.msra.mxu0 %v41
    %125 = vmatprep.subr.mxu0 0.0
    %126 = vmatpush2.msra.mxu0 0.0
    %127 = vmatprep.subr.mxu0 0.0
    %128 = vmatpush2.msra.mxu0 0.0
    %129 = vmatprep.subr.mxu0 0.0
    %130 = vmatpush2.msra.mxu0 0.0
    %131 = vmatprep.subr.mxu0 0.0
    %132 = vmatpush2.msra.mxu0 0.0
    %133 = vmatprep.subr.mxu0 0.0
    %134 = vmatpush2.msra.mxu0 0.0
    %135 = vmatprep.subr.mxu0 0.0
    %136 = vmatpush2.msra.mxu0 0.0
    %137 = vmatprep.subr.mxu0 0.0
    %138 = vmatpush2.msra.mxu0 0.0
    %139 = vmatprep.subr.mxu0 0.0
    %140 = vmatpush2.msra.mxu0 0.0
    %141 = vmatprep.subr.mxu0 0.0
    %142 = vmatpush2.msra.mxu0 0.0
    %143 = vmatprep.subr.mxu0 0.0
    %144 = vmatpush2.msra.mxu0 0.0
    %145 = vmatprep.subr.mxu0 0.0
    %146 = vmatpush2.msra.mxu0 0.0
    %147 = vmatprep.subr.mxu0 0.0
    %148 = vmatpush2.msra.mxu0 0.0
    %149 = vmatprep.subr.mxu0 0.0
    %150 = vmatpush2.msra.mxu0 0.0
    %151 = vmatprep.subr.mxu0 0.0
    %152 = vmatpush2.msra.mxu0 0.0
    %153 = vmatprep.subr.mxu0 0.0
    %154 = vmatpush2.msra.mxu0 0.0
    %155 = vmatprep.subr.mxu0 0.0
    %156 = vmatpush2.msra.mxu0 0.0
    %157 = vmatprep.mubr.f32.mxu0 0.0
    %158 = vmatmul.mubr.f32.gmra.mxu0 %v91
    %v159 = vpop.f32.mrf.mxu0
    %v160 = vadd.f32 0.0, %v159
    %v161 = vpop.f32.mrf.mxu0
    %v162 = vadd.f32 0.0, %v161
    %163 = vdwg.mxu0
    %164 = vmatprep.subr.mxu0 0.0
    %165 = vmatpush1.msra.mxu0 0.0
    %166 = vmatprep.subr.mxu0 0.0
    %167 = vmatpush1.msra.mxu0 0.0
    %168 = vmatprep.subr.mxu0 0.0
    %169 = vmatpush1.msra.mxu0 0.0
    %170 = vmatprep.subr.mxu0 0.0
    %171 = vmatpush1.msra.mxu0 0.0
    %172 = vmatprep.subr.mxu0 0.0
    %173 = vmatpush1.msra.mxu0 0.0
    %174 = vmatprep.subr.mxu0 0.0
    %175 = vmatpush1.msra.mxu0 0.0
    %176 = vmatprep.subr.mxu0 0.0
    %177 = vmatpush1.msra.mxu0 0.0
    %178 = vmatprep.subr.mxu0 0.0
    %179 = vmatpush1.msra.mxu0 0.0
    %180 = vmatprep.subr.mxu0 0.0
    %181 = vmatpush1.msra.mxu0 0.0
    %182 = vmatprep.subr.mxu0 0.0
    %183 = vmatpush1.msra.mxu0 0.0
    %184 = vmatprep.subr.mxu0 0.0
    %185 = vmatpush1.msra.mxu0 0.0
    %186 = vmatprep.subr.mxu0 0.0
    %187 = vmatpush1.msra.mxu0 0.0
    %188 = vmatprep.subr.mxu0 %v80
    %189 = vmatpush1.msra.mxu0 %v79
    %190 = vmatprep.subr.mxu0 %v68
    %191 = vmatpush1.msra.mxu0 %v67
    %192 = vmatprep.subr.mxu0 %v56
    %193 = vmatpush1.msra.mxu0 %v55
    %194 = vmatprep.subr.mxu0 %v44
    %195 = vmatpush1.msra.mxu0 %v43
    %196 = vmatprep.subr.mxu0 0.0
    %197 = vmatpush2.msra.mxu0 0.0
    %198 = vmatprep.subr.mxu0 0.0
    %199 = vmatpush2.msra.mxu0 0.0
    %200 = vmatprep.subr.mxu0 0.0
    %201 = vmatpush2.msra.mxu0 0.0
    %202 = vmatprep.subr.mxu0 0.0
    %203 = vmatpush2.msra.mxu0 0.0
    %204 = vmatprep.subr.mxu0 0.0
    %205 = vmatpush2.msra.mxu0 0.0
    %206 = vmatprep.subr.mxu0 0.0
    %207 = vmatpush2.msra.mxu0 0.0
    %208 = vmatprep.subr.mxu0 0.0
    %209 = vmatpush2.msra.mxu0 0.0
    %210 = vmatprep.subr.mxu0 0.0
    %211 = vmatpush2.msra.mxu0 0.0
    %212 = vmatprep.subr.mxu0 0.0
    %213 = vmatpush2.msra.mxu0 0.0
    %214 = vmatprep.subr.mxu0 0.0
    %215 = vmatpush2.msra.mxu0 0.0
    %216 = vmatprep.subr.mxu0 0.0
    %217 = vmatpush2.msra.mxu0 0.0
    %218 = vmatprep.subr.mxu0 0.0
    %219 = vmatpush2.msra.mxu0 0.0
    %220 = vmatprep.subr.mxu0 0.0
    %221 = vmatpush2.msra.mxu0 0.0
    %222 = vmatprep.subr.mxu0 0.0
    %223 = vmatpush2.msra.mxu0 0.0
    %224 = vmatprep.subr.mxu0 0.0
    %225 = vmatpush2.msra.mxu0 0.0
    %226 = vmatprep.subr.mxu0 0.0
    %227 = vmatpush2.msra.mxu0 0.0
    %228 = vmatprep.mubr.f32.mxu0 0.0
    %229 = vmatmul.mubr.f32.gmra.mxu0 %v91
    %v230 = vpop.f32.mrf.mxu0
    %v231 = vadd.f32 0.0, %v230
    %v232 = vpop.f32.mrf.mxu0
    %v233 = vadd.f32 0.0, %v232
    %234 = vdwg.mxu0
    %235 = vmatprep.subr.mxu0 0.0
    %236 = vmatpush1.msra.mxu0 0.0
    %237 = vmatprep.subr.mxu0 0.0
    %238 = vmatpush1.msra.mxu0 0.0
    %239 = vmatprep.subr.mxu0 0.0
    %240 = vmatpush1.msra.mxu0 0.0
    %241 = vmatprep.subr.mxu0 0.0
    %242 = vmatpush1.msra.mxu0 0.0
    %243 = vmatprep.subr.mxu0 0.0
    %244 = vmatpush1.msra.mxu0 0.0
    %245 = vmatprep.subr.mxu0 0.0
    %246 = vmatpush1.msra.mxu0 0.0
    %247 = vmatprep.subr.mxu0 0.0
    %248 = vmatpush1.msra.mxu0 0.0
    %249 = vmatprep.subr.mxu0 0.0
    %250 = vmatpush1.msra.mxu0 0.0
    %251 = vmatprep.subr.mxu0 0.0
    %252 = vmatpush1.msra.mxu0 0.0
    %253 = vmatprep.subr.mxu0 0.0
    %254 = vmatpush1.msra.mxu0 0.0
    %255 = vmatprep.subr.mxu0 0.0
    %256 = vmatpush1.msra.mxu0 0.0
    %257 = vmatprep.subr.mxu0 0.0
    %258 = vmatpush1.msra.mxu0 0.0
    %259 = vmatprep.subr.mxu0 %v82
    %260 = vmatpush1.msra.mxu0 %v81
    %261 = vmatprep.subr.mxu0 %v70
    %262 = vmatpush1.msra.mxu0 %v69
    %263 = vmatprep.subr.mxu0 %v58
    %264 = vmatpush1.msra.mxu0 %v57
    %265 = vmatprep.subr.mxu0 %v46
    %266 = vmatpush1.msra.mxu0 %v45
    %267 = vmatprep.subr.mxu0 0.0
    %268 = vmatpush2.msra.mxu0 0.0
    %269 = vmatprep.subr.mxu0 0.0
    %270 = vmatpush2.msra.mxu0 0.0
    %271 = vmatprep.subr.mxu0 0.0
    %272 = vmatpush2.msra.mxu0 0.0
    %273 = vmatprep.subr.mxu0 0.0
    %274 = vmatpush2.msra.mxu0 0.0
    %275 = vmatprep.subr.mxu0 0.0
    %276 = vmatpush2.msra.mxu0 0.0
    %277 = vmatprep.subr.mxu0 0.0
    %278 = vmatpush2.msra.mxu0 0.0
    %279 = vmatprep.subr.mxu0 0.0
    %280 = vmatpush2.msra.mxu0 0.0
    %281 = vmatprep.subr.mxu0 0.0
    %282 = vmatpush2.msra.mxu0 0.0
    %283 = vmatprep.subr.mxu0 0.0
    %284 = vmatpush2.msra.mxu0 0.0
    %285 = vmatprep.subr.mxu0 0.0
    %286 = vmatpush2.msra.mxu0 0.0
    %287 = vmatprep.subr.mxu0 0.0
    %288 = vmatpush2.msra.mxu0 0.0
    %289 = vmatprep.subr.mxu0 0.0
    %290 = vmatpush2.msra.mxu0 0.0
    %291 = vmatprep.subr.mxu0 0.0
    %292 = vmatpush2.msra.mxu0 0.0
    %293 = vmatprep.subr.mxu0 0.0
    %294 = vmatpush2.msra.mxu0 0.0
    %295 = vmatprep.subr.mxu0 0.0
    %296 = vmatpush2.msra.mxu0 0.0
    %297 = vmatprep.subr.mxu0 0.0
    %298 = vmatpush2.msra.mxu0 0.0
    %299 = vmatprep.mubr.f32.mxu0 0.0
    %300 = vmatmul.mubr.f32.gmra.mxu0 %v91
    %v301 = vpop.f32.mrf.mxu0
    %v302 = vadd.f32 0.0, %v301
    %v303 = vpop.f32.mrf.mxu0
    %v304 = vadd.f32 0.0, %v303
    %305 = vdwg.mxu0
    %306 = vmatprep.subr.mxu0 0.0
    %307 = vmatpush1.msra.mxu0 0.0
    %308 = vmatprep.subr.mxu0 0.0
    %309 = vmatpush1.msra.mxu0 0.0
    %310 = vmatprep.subr.mxu0 0.0
    %311 = vmatpush1.msra.mxu0 0.0
    %312 = vmatprep.subr.mxu0 0.0
    %313 = vmatpush1.msra.mxu0 0.0
    %314 = vmatprep.subr.mxu0 0.0
    %315 = vmatpush1.msra.mxu0 0.0
    %316 = vmatprep.subr.mxu0 0.0
    %317 = vmatpush1.msra.mxu0 0.0
    %318 = vmatprep.subr.mxu0 0.0
    %319 = vmatpush1.msra.mxu0 0.0
    %320 = vmatprep.subr.mxu0 0.0
    %321 = vmatpush1.msra.mxu0 0.0
    %322 = vmatprep.subr.mxu0 0.0
    %323 = vmatpush1.msra.mxu0 0.0
    %324 = vmatprep.subr.mxu0 0.0
    %325 = vmatpush1.msra.mxu0 0.0
    %326 = vmatprep.subr.mxu0 0.0
    %327 = vmatpush1.msra.mxu0 0.0
    %328 = vmatprep.subr.mxu0 0.0
    %329 = vmatpush1.msra.mxu0 0.0
    %330 = vmatprep.subr.mxu0 %v84
    %331 = vmatpush1.msra.mxu0 %v83
    %332 = vmatprep.subr.mxu0 %v72
    %333 = vmatpush1.msra.mxu0 %v71
    %334 = vmatprep.subr.mxu0 %v60
    %335 = vmatpush1.msra.mxu0 %v59
    %336 = vmatprep.subr.mxu0 %v48
    %337 = vmatpush1.msra.mxu0 %v47
    %338 = vmatprep.subr.mxu0 0.0
    %339 = vmatpush2.msra.mxu0 0.0
    %340 = vmatprep.subr.mxu0 0.0
    %341 = vmatpush2.msra.mxu0 0.0
    %342 = vmatprep.subr.mxu0 0.0
    %343 = vmatpush2.msra.mxu0 0.0
    %344 = vmatprep.subr.mxu0 0.0
    %345 = vmatpush2.msra.mxu0 0.0
    %346 = vmatprep.subr.mxu0 0.0
    %347 = vmatpush2.msra.mxu0 0.0
    %348 = vmatprep.subr.mxu0 0.0
    %349 = vmatpush2.msra.mxu0 0.0
    %350 = vmatprep.subr.mxu0 0.0
    %351 = vmatpush2.msra.mxu0 0.0
    %352 = vmatprep.subr.mxu0 0.0
    %353 = vmatpush2.msra.mxu0 0.0
    %354 = vmatprep.subr.mxu0 0.0
    %355 = vmatpush2.msra.mxu0 0.0
    %356 = vmatprep.subr.mxu0 0.0
    %357 = vmatpush2.msra.mxu0 0.0
    %358 = vmatprep.subr.mxu0 0.0
    %359 = vmatpush2.msra.mxu0 0.0
    %360 = vmatprep.subr.mxu0 0.0
    %361 = vmatpush2.msra.mxu0 0.0
    %362 = vmatprep.subr.mxu0 0.0
    %363 = vmatpush2.msra.mxu0 0.0
    %364 = vmatprep.subr.mxu0 0.0
    %365 = vmatpush2.msra.mxu0 0.0
    %366 = vmatprep.subr.mxu0 0.0
    %367 = vmatpush2.msra.mxu0 0.0
    %368 = vmatprep.subr.mxu0 0.0
    %369 = vmatpush2.msra.mxu0 0.0
    %370 = vmatprep.mubr.f32.mxu0 0.0
    %371 = vmatmul.mubr.f32.gmra.mxu0 %v91
    %v372 = vpop.f32.mrf.mxu0
    %v373 = vadd.f32 0.0, %v372
    %v374 = vpop.f32.mrf.mxu0
    %v375 = vadd.f32 0.0, %v374
    %376 = vdwg.mxu0
    %377 = vmatprep.subr.mxu0 0.0
    %378 = vmatpush1.msra.mxu0 0.0
    %379 = vmatprep.subr.mxu0 0.0
    %380 = vmatpush1.msra.mxu0 0.0
    %381 = vmatprep.subr.mxu0 0.0
    %382 = vmatpush1.msra.mxu0 0.0
    %383 = vmatprep.subr.mxu0 0.0
    %384 = vmatpush1.msra.mxu0 0.0
    %385 = vmatprep.subr.mxu0 0.0
    %386 = vmatpush1.msra.mxu0 0.0
    %387 = vmatprep.subr.mxu0 0.0
    %388 = vmatpush1.msra.mxu0 0.0
    %389 = vmatprep.subr.mxu0 0.0
    %390 = vmatpush1.msra.mxu0 0.0
    %391 = vmatprep.subr.mxu0 0.0
    %392 = vmatpush1.msra.mxu0 0.0
    %393 = vmatprep.subr.mxu0 0.0
    %394 = vmatpush1.msra.mxu0 0.0
    %395 = vmatprep.subr.mxu0 0.0
    %396 = vmatpush1.msra.mxu0 0.0
    %397 = vmatprep.subr.mxu0 0.0
    %398 = vmatpush1.msra.mxu0 0.0
    %399 = vmatprep.subr.mxu0 0.0
    %400 = vmatpush1.msra.mxu0 0.0
    %401 = vmatprep.subr.mxu0 %v86
    %402 = vmatpush1.msra.mxu0 %v85
    %403 = vmatprep.subr.mxu0 %v74
    %404 = vmatpush1.msra.mxu0 %v73
    %405 = vmatprep.subr.mxu0 %v62
    %406 = vmatpush1.msra.mxu0 %v61
    %407 = vmatprep.subr.mxu0 %v50
    %408 = vmatpush1.msra.mxu0 %v49
    %409 = vmatprep.subr.mxu0 0.0
    %410 = vmatpush2.msra.mxu0 0.0
    %411 = vmatprep.subr.mxu0 0.0
    %412 = vmatpush2.msra.mxu0 0.0
    %413 = vmatprep.subr.mxu0 0.0
    %414 = vmatpush2.msra.mxu0 0.0
    %415 = vmatprep.subr.mxu0 0.0
    %416 = vmatpush2.msra.mxu0 0.0
    %417 = vmatprep.subr.mxu0 0.0
    %418 = vmatpush2.msra.mxu0 0.0
    %419 = vmatprep.subr.mxu0 0.0
    %420 = vmatpush2.msra.mxu0 0.0
    %421 = vmatprep.subr.mxu0 0.0
    %422 = vmatpush2.msra.mxu0 0.0
    %423 = vmatprep.subr.mxu0 0.0
    %424 = vmatpush2.msra.mxu0 0.0
    %425 = vmatprep.subr.mxu0 0.0
    %426 = vmatpush2.msra.mxu0 0.0
    %427 = vmatprep.subr.mxu0 0.0
    %428 = vmatpush2.msra.mxu0 0.0
    %429 = vmatprep.subr.mxu0 0.0
    %430 = vmatpush2.msra.mxu0 0.0
    %431 = vmatprep.subr.mxu0 0.0
    %432 = vmatpush2.msra.mxu0 0.0
    %433 = vmatprep.subr.mxu0 0.0
    %434 = vmatpush2.msra.mxu0 0.0
    %435 = vmatprep.subr.mxu0 0.0
    %436 = vmatpush2.msra.mxu0 0.0
    %437 = vmatprep.subr.mxu0 0.0
    %438 = vmatpush2.msra.mxu0 0.0
    %439 = vmatprep.subr.mxu0 0.0
    %440 = vmatpush2.msra.mxu0 0.0
    %441 = vmatprep.mubr.f32.mxu0 0.0
    %442 = vmatmul.mubr.f32.gmra.mxu0 %v91
    %v443 = vpop.f32.mrf.mxu0
    %v444 = vadd.f32 0.0, %v443
    %v445 = vpop.f32.mrf.mxu0
    %v446 = vadd.f32 0.0, %v445
    %447 = vdwg.mxu0
    %448 = vmatprep.subr.mxu0 0.0
    %449 = vmatpush1.msra.mxu0 0.0
    %450 = vmatprep.subr.mxu0 0.0
    %451 = vmatpush1.msra.mxu0 0.0
    %452 = vmatprep.subr.mxu0 0.0
    %453 = vmatpush1.msra.mxu0 0.0
    %454 = vmatprep.subr.mxu0 0.0
    %455 = vmatpush1.msra.mxu0 0.0
    %456 = vmatprep.subr.mxu0 0.0
    %457 = vmatpush1.msra.mxu0 0.0
    %458 = vmatprep.subr.mxu0 0.0
    %459 = vmatpush1.msra.mxu0 0.0
    %460 = vmatprep.subr.mxu0 0.0
    %461 = vmatpush1.msra.mxu0 0.0
    %462 = vmatprep.subr.mxu0 0.0
    %463 = vmatpush1.msra.mxu0 0.0
    %464 = vmatprep.subr.mxu0 0.0
    %465 = vmatpush1.msra.mxu0 0.0
    %466 = vmatprep.subr.mxu0 0.0
    %467 = vmatpush1.msra.mxu0 0.0
    %468 = vmatprep.subr.mxu0 0.0
    %469 = vmatpush1.msra.mxu0 0.0
    %470 = vmatprep.subr.mxu0 0.0
    %471 = vmatpush1.msra.mxu0 0.0
    %472 = vmatprep.subr.mxu0 %v88
    %473 = vmatpush1.msra.mxu0 %v87
    %474 = vmatprep.subr.mxu0 %v76
    %475 = vmatpush1.msra.mxu0 %v75
    %476 = vmatprep.subr.mxu0 %v64
    %477 = vmatpush1.msra.mxu0 %v63
    %478 = vmatprep.subr.mxu0 %v52
    %479 = vmatpush1.msra.mxu0 %v51
    %480 = vmatprep.subr.mxu0 0.0
    %481 = vmatpush2.msra.mxu0 0.0
    %482 = vmatprep.subr.mxu0 0.0
    %483 = vmatpush2.msra.mxu0 0.0
    %484 = vmatprep.subr.mxu0 0.0
    %485 = vmatpush2.msra.mxu0 0.0
    %486 = vmatprep.subr.mxu0 0.0
    %487 = vmatpush2.msra.mxu0 0.0
    %488 = vmatprep.subr.mxu0 0.0
    %489 = vmatpush2.msra.mxu0 0.0
    %490 = vmatprep.subr.mxu0 0.0
    %491 = vmatpush2.msra.mxu0 0.0
    %492 = vmatprep.subr.mxu0 0.0
    %493 = vmatpush2.msra.mxu0 0.0
    %494 = vmatprep.subr.mxu0 0.0
    %495 = vmatpush2.msra.mxu0 0.0
    %496 = vmatprep.subr.mxu0 0.0
    %497 = vmatpush2.msra.mxu0 0.0
    %498 = vmatprep.subr.mxu0 0.0
    %499 = vmatpush2.msra.mxu0 0.0
    %500 = vmatprep.subr.mxu0 0.0
    %501 = vmatpush2.msra.mxu0 0.0
    %502 = vmatprep.subr.mxu0 0.0
    %503 = vmatpush2.msra.mxu0 0.0
    %504 = vmatprep.subr.mxu0 0.0
    %505 = vmatpush2.msra.mxu0 0.0
    %506 = vmatprep.subr.mxu0 0.0
    %507 = vmatpush2.msra.mxu0 0.0
    %508 = vmatprep.subr.mxu0 0.0
    %509 = vmatpush2.msra.mxu0 0.0
    %510 = vmatprep.subr.mxu0 0.0
    %511 = vmatpush2.msra.mxu0 0.0
    %512 = vmatprep.mubr.f32.mxu0 0.0
    %513 = vmatmul.mubr.f32.gmra.mxu0 %v91
    %v514 = vpop.f32.mrf.mxu0
    %v515 = vadd.f32 0.0, %v514
    %v516 = vpop.f32.mrf.mxu0
    %v517 = vadd.f32 0.0, %v516
    %518 = vdwg.mxu0
    %v519 = vld [vmem:[%s1] sm:$0x3]
    %v520 = vld [vmem:[%s6] sm:$0xff]
    %v521 = vld [vmem:[%s6 + $0x8] sm:$0xff]
    %v522 = vld [vmem:[%s6 + $0x10] sm:$0xff]
    %v523 = vld [vmem:[%s6 + $0x18] sm:$0xff]
    %v524 = vld [vmem:[%s6 + $0x20] sm:$0xff]
    %v525 = vld [vmem:[%s6 + $0x28] sm:$0xff]
    %v526 = vld [vmem:[%s6 + $0x30] sm:$0xff]
    %v527 = vld [vmem:[%s6 + $0x38] sm:$0xff]
    %v528 = vld [vmem:[%s6 + $0x40] sm:$0xff]
    %v529 = vld [vmem:[%s6 + $0x48] sm:$0xff]
    %v530 = vld [vmem:[%s6 + $0x50] sm:$0xff]
    %v531 = vld [vmem:[%s6 + $0x58] sm:$0xff]
    %v532 = vld [vmem:[%s6 + $0x60] sm:$0xff]
    %v533 = vld [vmem:[%s6 + $0x68] sm:$0xff]
    %v534 = vld [vmem:[%s6 + $0x70] sm:$0xff]
    %v535 = vld [vmem:[%s6 + $0x78] sm:$0xff]
    %v536 = vld [vmem:[%s6 + $0x80] sm:$0xff]
    %v537 = vld [vmem:[%s6 + $0x88] sm:$0xff]
    %v538 = vld [vmem:[%s6 + $0x90] sm:$0xff]
    %v539 = vld [vmem:[%s6 + $0x98] sm:$0xff]
    %v540 = vld [vmem:[%s6 + $0xa0] sm:$0xff]
    %v541 = vld [vmem:[%s6 + $0xa8] sm:$0xff]
    %v542 = vld [vmem:[%s6 + $0xb0] sm:$0xff]
    %v543 = vld [vmem:[%s6 + $0xb8] sm:$0xff]
    %v544 = vld [vmem:[%s6 + $0xc0] sm:$0xff]
    %v545 = vld [vmem:[%s6 + $0xc8] sm:$0xff]
    %v546 = vld [vmem:[%s6 + $0xd0] sm:$0xff]
    %v547 = vld [vmem:[%s6 + $0xd8] sm:$0xff]
    %v548 = vld [vmem:[%s6 + $0xe0] sm:$0xff]
    %v549 = vld [vmem:[%s6 + $0xe8] sm:$0xff]
    %v550 = vld [vmem:[%s6 + $0xf0] sm:$0xff]
    %v551 = vld [vmem:[%s6 + $0xf8] sm:$0xff]
    %552 = vmatprep.subr.mxu0 %v551
    %553 = vmatpush1.msra.mxu0 %v550
    %554 = vmatprep.subr.mxu0 %v549
    %555 = vmatpush1.msra.mxu0 %v548
    %556 = vmatprep.subr.mxu0 %v547
    %557 = vmatpush1.msra.mxu0 %v546
    %558 = vmatprep.subr.mxu0 %v545
    %559 = vmatpush1.msra.mxu0 %v544
    %560 = vmatprep.subr.mxu0 %v543
    %561 = vmatpush1.msra.mxu0 %v542
    %562 = vmatprep.subr.mxu0 %v541
    %563 = vmatpush1.msra.mxu0 %v540
    %564 = vmatprep.subr.mxu0 %v539
    %565 = vmatpush1.msra.mxu0 %v538
    %566 = vmatprep.subr.mxu0 %v537
    %567 = vmatpush1.msra.mxu0 %v536
    %568 = vmatprep.subr.mxu0 %v535
    %569 = vmatpush1.msra.mxu0 %v534
    %570 = vmatprep.subr.mxu0 %v533
    %571 = vmatpush1.msra.mxu0 %v532
    %572 = vmatprep.subr.mxu0 %v531
    %573 = vmatpush1.msra.mxu0 %v530
    %574 = vmatprep.subr.mxu0 %v529
    %575 = vmatpush1.msra.mxu0 %v528
    %576 = vmatprep.subr.mxu0 %v527
    %577 = vmatpush1.msra.mxu0 %v526
    %578 = vmatprep.subr.mxu0 %v525
    %579 = vmatpush1.msra.mxu0 %v524
    %580 = vmatprep.subr.mxu0 %v523
    %581 = vmatpush1.msra.mxu0 %v522
    %582 = vmatprep.subr.mxu0 %v521
    %583 = vmatpush1.msra.mxu0 %v520
    %584 = vmatprep.subr.mxu0 0.0
    %585 = vmatpush2.msra.mxu0 0.0
    %586 = vmatprep.subr.mxu0 0.0
    %587 = vmatpush2.msra.mxu0 0.0
    %588 = vmatprep.subr.mxu0 0.0
    %589 = vmatpush2.msra.mxu0 0.0
    %590 = vmatprep.subr.mxu0 0.0
    %591 = vmatpush2.msra.mxu0 0.0
    %592 = vmatprep.subr.mxu0 0.0
    %593 = vmatpush2.msra.mxu0 0.0
    %594 = vmatprep.subr.mxu0 0.0
    %595 = vmatpush2.msra.mxu0 0.0
    %596 = vmatprep.subr.mxu0 0.0
    %597 = vmatpush2.msra.mxu0 0.0
    %598 = vmatprep.subr.mxu0 0.0
    %599 = vmatpush2.msra.mxu0 0.0
    %600 = vmatprep.subr.mxu0 0.0
    %601 = vmatpush2.msra.mxu0 0.0
    %602 = vmatprep.subr.mxu0 0.0
    %603 = vmatpush2.msra.mxu0 0.0
    %604 = vmatprep.subr.mxu0 0.0
    %605 = vmatpush2.msra.mxu0 0.0
    %606 = vmatprep.subr.mxu0 0.0
    %607 = vmatpush2.msra.mxu0 0.0
    %608 = vmatprep.subr.mxu0 0.0
    %609 = vmatpush2.msra.mxu0 0.0
    %610 = vmatprep.subr.mxu0 0.0
    %611 = vmatpush2.msra.mxu0 0.0
    %612 = vmatprep.subr.mxu0 0.0
    %613 = vmatpush2.msra.mxu0 0.0
    %614 = vmatprep.subr.mxu0 0.0
    %615 = vmatpush2.msra.mxu0 0.0
    %616 = vmatprep.mubr.f32.mxu0 0.0
    %617 = vmatmul.mubr.f32.gmra.mxu0 %v519
    %v618 = vpop.f32.mrf.mxu0
    %v619 = vadd.f32 0.0, %v618
    %v620 = vpop.f32.mrf.mxu0
    %v621 = vadd.f32 0.0, %v620
    %622 = vdwg.mxu0
    %v623 = vld [vmem:[%s2] sm:$0xff]
    %v624 = vld [vmem:[%s2 + $0x8] sm:$0xf]
    %v627 = vlaneseq
    %v628 = vshrl.u32 %v627, 7
    %v629 = vsub.s32 0, %v628
    %v630 = vrot.slane %v623, %v629
    %v631 = vlaneseq
    %v632 = vshrl.u32 %v631, 7
    %v633 = vsub.s32 1, %v632
    %v634 = vrot.slane %v623, %v633
    %v635 = vlaneseq
    %v636 = vshrl.u32 %v635, 7
    %v637 = vsub.s32 2, %v636
    %v638 = vrot.slane %v623, %v637
    %v639 = vlaneseq
    %v640 = vshrl.u32 %v639, 7
    %v641 = vsub.s32 3, %v640
    %v642 = vrot.slane %v623, %v641
    %v643 = vlaneseq
    %v644 = vshrl.u32 %v643, 7
    %v645 = vsub.s32 4, %v644
    %v646 = vrot.slane %v623, %v645
    %v647 = vlaneseq
    %v648 = vshrl.u32 %v647, 7
    %v649 = vsub.s32 5, %v648
    %v650 = vrot.slane %v623, %v649
    %v651 = vlaneseq
    %v652 = vshrl.u32 %v651, 7
    %v653 = vsub.s32 6, %v652
    %v654 = vrot.slane %v623, %v653
    %v655 = vlaneseq
    %v656 = vshrl.u32 %v655, 7
    %v657 = vsub.s32 7, %v656
    %v658 = vrot.slane %v623, %v657
    %v659 = vlaneseq
    %v660 = vshrl.u32 %v659, 7
    %v661 = vsub.s32 0, %v660
    %v662 = vrot.slane %v624, %v661
    %v663 = vlaneseq
    %v664 = vshrl.u32 %v663, 7
    %v665 = vsub.s32 1, %v664
    %v666 = vrot.slane %v624, %v665
    %v667 = vlaneseq
    %v668 = vshrl.u32 %v667, 7
    %v669 = vsub.s32 2, %v668
    %v670 = vrot.slane %v624, %v669
    %v671 = vlaneseq
    %v672 = vshrl.u32 %v671, 7
    %v673 = vsub.s32 3, %v672
    %v674 = vrot.slane %v624, %v673
    %v687 = vmul.f32 %v160, %v630
    %v688 = vmul.f32 %v162, %v634
    %v689 = vmul.f32 %v231, %v638
    %v690 = vmul.f32 %v233, %v642
    %v691 = vmul.f32 %v302, %v646
    %v692 = vmul.f32 %v304, %v650
    %v693 = vmul.f32 %v373, %v654
    %v694 = vmul.f32 %v375, %v658
    %v695 = vmul.f32 %v444, %v662
    %v696 = vmul.f32 %v446, %v666
    %v697 = vmul.f32 %v515, %v670
    %v698 = vmul.f32 %v517, %v674
    %vm699 = vcmask 1041408
    %v700 = vsel %vm699, %v687, 0.0
    %v701 = vsel %vm699, %v688, 0.0
    %v702 = vadd.f32 %v700, %v701
    %v703 = vsel %vm699, %v689, 0.0
    %v704 = vadd.f32 %v702, %v703
    %v705 = vsel %vm699, %v690, 0.0
    %v706 = vadd.f32 %v704, %v705
    %v707 = vsel %vm699, %v691, 0.0
    %v708 = vadd.f32 %v706, %v707
    %v709 = vsel %vm699, %v692, 0.0
    %v710 = vadd.f32 %v708, %v709
    %v711 = vsel %vm699, %v693, 0.0
    %v712 = vadd.f32 %v710, %v711
    %v713 = vsel %vm699, %v694, 0.0
    %v714 = vadd.f32 %v712, %v713
    %v715 = vsel %vm699, %v695, 0.0
    %v716 = vadd.f32 %v714, %v715
    %v717 = vsel %vm699, %v696, 0.0
    %v718 = vadd.f32 %v716, %v717
    %v719 = vsel %vm699, %v697, 0.0
    %v720 = vadd.f32 %v718, %v719
    %v721 = vsel %vm699, %v698, 0.0
    %v722 = vadd.f32 %v720, %v721
    %723 = vadd.xlane.f32.xlu0 %v722
    %v724 = vpop.xlane.xlu0 %723
    %v725 = vld [vmem:[#allocation3] sm:$0x3]
    %v727 = vlaneseq
    %v728 = vshrl.u32 %v727, 7
    %v729 = vsub.s32 0, %v728
    %v730 = vrot.slane %v725, %v729
    %v731 = vlaneseq
    %v732 = vshrl.u32 %v731, 7
    %v733 = vsub.s32 1, %v732
    %v734 = vrot.slane %v725, %v733
    %v737 = vmul.f32 %v619, %v730
    %v738 = vmul.f32 %v621, %v734
    %v739 = vsel %vm699, %v737, 0.0
    %vm740 = vcmask 58368
    %v741 = vsel %vm740, %v738, 0.0
    %v742 = vadd.f32 %v739, %v741
    %743 = vadd.xlane.f32.xlu0 %v742
    %v744 = vpop.xlane.xlu0 %743
    %v745 = vadd.f32 %v724, %v744
    %s746 = sld [smem:[#allocation2]]
    %v747 = vstv %s746
    %v748 = vadd.f32 %v745, %v747
    %v750 = vlaneseq
    %v751 = vand.u32 %v750, 127
    %v752 = vlaneseq
    %v753 = vshrl.u32 %v752, 7
    %v754 = vsub.s32 %v751, %v753
    %v755 = vrot.slane %v748, %v754
    %vm757 = vcmask 8192
    %758 = vst.msk [vmem:[#allocation6] sm:$0x1] %vm757, %v755
    // Predicated region
    $region34: #{tpu_custom_call.1} parent=1 // pred_check
      _
    $region35: #{tpu_custom_call.1} parent=1 // pred_check_branch
      %760 = sbr.rel (0) target = $region37
    $region36: #{tpu_custom_call.1} parent=1 // pred_region
      %s762 = ssub.s32 16, 16
      %763 = vsyncadd [#allocation5], %s762
      %s765 = sshll.u32 [#allocation6], 4
      %s766 = int_to_ptr.vmem [resolvable:$true] %s765
      %768 = dma.vmem_to_hbm [thread:$0]  %s766, 16, %s7, [#allocation5]
    $region37: #{tpu_custom_call.1} parent=1 // pred_fallthru
      _
    // Predicated region
    $region38: #{tpu_custom_call.1} parent=1 // pred_check
      _
    $region39: #{tpu_custom_call.1} parent=1 // pred_check_branch
      %770 = sbr.rel (0) target = $region41
    $region40: #{tpu_custom_call.1} parent=1 // pred_region
      %771 = dma.done [#allocation5], 16
    $region41: #{tpu_custom_call.1} parent=1 // pred_fallthru
      _
    %772 = vsyncpa [#allocation4], 1
    %773 = vsyncpa [#allocation5], 1

</llo_original>
